<compile_context>
chip_gen: v7x
topology: tpu7x:2x2x1
jax: 0.10.0
libtpu: 0.0.40
codegen_flags: <defaults>
</compile_context>

<pallas_src>
import functools

import jax
import jax.numpy as jnp
from jax.experimental import pallas as pl
from jax.experimental.pallas import tpu as pltpu

_LANE = 128
_ACC_ROWS = 8                 # accumulator / output block sublane height
_MAX_TILE_ROWS = 2048         # 2048*128*4 B = 1 MiB per input buffer
_NUM_CORES = 2                # leading "parallel" axis (megacore on v7x)


def _huber_kernel(params_ref, x_ref, out_ref, *, bpc, n_blocks_total, rem_last):
    c = pl.program_id(0)          # core / parallel index
    i = pl.program_id(1)          # reduction step within this core
    gb = c * bpc + i              # global block index (small, fits int32)

    # Zero this core's resident accumulator block on its first step.
    @pl.when(i == 0)
    def _():
        out_ref[...] = jnp.zeros_like(out_ref)

    delta = params_ref[0]
    half_d2 = params_ref[1]       # 0.5 * delta^2, precomputed in the wrapper

    blk = x_ref[...]              # (tile_rows, 128) f32
    n = jnp.abs(blk)
    l = jnp.where(n < delta, 0.5 * n * n, n * delta - half_d2)

    def fold(v):
        # (tile_rows, 128) -> (8, 128) by stacking vregs and adding (VPU only).
        r, cmax = v.shape
        return jnp.sum(v.reshape(r // _ACC_ROWS, _ACC_ROWS, cmax), axis=0)

    # All blocks before the global last one are fully valid: no mask.
    @pl.when(gb < n_blocks_total - 1)
    def _():
        out_ref[...] += fold(l)

    # Only the single global last block pays for the validity mask
    # (covers ragged rows / lane padding; correct for any delta sign).
    @pl.when(gb == n_blocks_total - 1)
    def _():
        r, cmax = l.shape
        flat = (jax.lax.broadcasted_iota(jnp.int32, (r, cmax), 0) * cmax
                + jax.lax.broadcasted_iota(jnp.int32, (r, cmax), 1))
        lm = jnp.where(flat < rem_last, l, jnp.float32(0.0))
        out_ref[...] += fold(lm)

    # Blocks with gb > n_blocks_total - 1 (grid padding) contribute nothing.


def huber_func(x, delta, reduction=None):
    """Pallas equivalent of HuberFunc(reduction)(x, delta). Returns scalar f32."""
    is_mean = reduction is None or reduction == "mean"

    xf = jnp.asarray(x, jnp.float32).reshape(-1)
    n_valid = xf.shape[0]

    # Pad only if needed so the flat length is a multiple of 8*128; this makes
    # the [rows, 128] reshape free and keeps rows a multiple of 8.
    chunk = _ACC_ROWS * _LANE
    n_padded = ((n_valid + chunk - 1) // chunk) * chunk
    if n_padded != n_valid:
        xf = jnp.pad(xf, (0, n_padded - n_valid))  # copying fallback, ragged sizes only
    rows = n_padded // _LANE
    x2d = xf.reshape(rows, _LANE)

    tile_rows = min(_MAX_TILE_ROWS, rows)
    n_blocks_total = pl.cdiv(rows, tile_rows)
    bpc = pl.cdiv(n_blocks_total, _NUM_CORES)          # blocks per core
    block_elems = tile_rows * _LANE
    rem_last = n_valid - (n_blocks_total - 1) * block_elems  # valid elems in last block

    d = jnp.asarray(delta, jnp.float32)
    params = jnp.stack([d, 0.5 * d * d])               # [delta, 0.5*delta^2] in SMEM

    last_block = n_blocks_total - 1

    partials = pl.pallas_call(
        functools.partial(_huber_kernel, bpc=bpc,
                          n_blocks_total=n_blocks_total, rem_last=rem_last),
        out_shape=jax.ShapeDtypeStruct((_NUM_CORES * _ACC_ROWS, _LANE), jnp.float32),
        grid_spec=pl.GridSpec(
            grid=(_NUM_CORES, bpc),
            in_specs=[
                pl.BlockSpec(memory_space=pltpu.MemorySpace.SMEM),   # [delta, 0.5*d^2]
                pl.BlockSpec(
                    (tile_rows, _LANE),
                    # clamp so grid-padding steps never index past the array
                    lambda c, i: (jnp.minimum(c * bpc + i, last_block), 0)),
            ],
            out_specs=pl.BlockSpec((_ACC_ROWS, _LANE), lambda c, i: (c, 0)),
        ),
        compiler_params=pltpu.CompilerParams(
            dimension_semantics=("parallel", "arbitrary")),
        cost_estimate=pl.CostEstimate(flops=6 * n_valid, transcendentals=0,
                                      bytes_accessed=4 * n_valid),
    )(params, x2d)

    total = jnp.sum(partials)          # single tiny cross-lane reduce, done once
    if is_mean:
        total = total / jnp.float32(n_valid)
    return total


def _huber_ref(x, delta, reduction=None):
    n = jnp.abs(jnp.asarray(x, jnp.float32))
    d = jnp.float32(delta)
    l = jnp.where(n < d, 0.5 * n * n, n * d - 0.5 * d * d)
    if reduction is None or reduction == "mean":
        return jnp.mean(l)
    return jnp.sum(l)


if __name__ == "__main__":
    key = jax.random.PRNGKey(0)

    # Shape implied by the module's typical use (NCHW feature map).
    x = jax.random.normal(key, (2, 4, 16, 16), dtype=jnp.float32)
    delta = 0.75

    out_mean = jax.block_until_ready(huber_func(x, delta, reduction=None))
    out_sum = jax.block_until_ready(huber_func(x, delta, reduction="sum"))
    ref_mean = _huber_ref(x, delta, reduction=None)
    ref_sum = _huber_ref(x, delta, reduction="sum")
    assert jnp.allclose(out_mean, ref_mean, rtol=1e-5, atol=1e-5), (out_mean, ref_mean)
    assert jnp.allclose(out_sum, ref_sum, rtol=1e-5, atol=1e-5), (out_sum, ref_sum)

    # Ragged size exercising the masked last block (pad + partial tile).
    x2 = jax.random.normal(jax.random.PRNGKey(1), (3, 5, 7), dtype=jnp.float32)
    out2 = jax.block_until_ready(huber_func(x2, 1.3, reduction="mean"))
    ref2 = _huber_ref(x2, 1.3, reduction="mean")
    assert jnp.allclose(out2, ref2, rtol=1e-5, atol=1e-5), (out2, ref2)

    # Negative delta exercises the correctness of masking padded zeros.
    out3 = jax.block_until_ready(huber_func(x2, -0.5, reduction="sum"))
    ref3 = _huber_ref(x2, -0.5, reduction="sum")
    assert jnp.allclose(out3, ref3, rtol=1e-5, atol=1e-5), (out3, ref3)

    print("KERNEL_OK")
</pallas_src>

<mosaic_0001>
module attributes {stable_mosaic.version = 11 : i64} {
  func.func @_huber_kernel(%arg0: i32, %arg1: i32, %arg2: memref<2xf32, #tpu.memory_space<smem>>, %arg3: memref<16x128xf32, #tpu.memory_space<vmem>>, %arg4: memref<8x128xf32, #tpu.memory_space<vmem>>) attributes {dimension_semantics = [#tpu.dimension_semantics<parallel>, #tpu.dimension_semantics<arbitrary>], iteration_bounds = array<i64: 2, 1>, scalar_prefetch = 0 : i64, scratch_operands = 0 : i64, tpu.core_type = #tpu.core_type<tc>, window_params = [{transform_indices = @transform_0, window_bounds = array<i64: 2>}, {transform_indices = @transform_1, window_bounds = array<i64: 16, 128>}, {transform_indices = @transform_2, window_bounds = array<i64: 8, 128>}]} {
    %c1_i32 = arith.constant 1 : i32
    %0 = arith.muli %arg0, %c1_i32 : i32
    %1 = arith.addi %0, %arg1 : i32
    %c0_i32 = arith.constant 0 : i32
    %2 = arith.cmpi eq, %arg1, %c0_i32 : i32
    %3 = arith.extui %2 : i1 to i32
    %c0_i32_0 = arith.constant 0 : i32
    %4 = arith.cmpi ne, %3, %c0_i32_0 : i32
    scf.if %4 {
      %cst_7 = arith.constant 0.000000e+00 : f32
      %25 = vector.broadcast %cst_7 : f32 to vector<8x128xf32>
      %c0_8 = arith.constant 0 : index
      %c0_9 = arith.constant 0 : index
      %26 = vector.load %arg4[%c0_8, %c0_9] : memref<8x128xf32, #tpu.memory_space<vmem>>, vector<8x128xf32>
      tpu.vector_store %arg4[%c0_8, %c0_9], %25 {strides = array<i32>} : memref<8x128xf32, #tpu.memory_space<vmem>>, vector<8x128xf32>,
    } else {
    }
    %c0 = arith.constant 0 : index
    %5 = memref.load %arg2[%c0] : memref<2xf32, #tpu.memory_space<smem>>
    %c1 = arith.constant 1 : index
    %6 = memref.load %arg2[%c1] : memref<2xf32, #tpu.memory_space<smem>>
    %c0_1 = arith.constant 0 : index
    %c0_2 = arith.constant 0 : index
    %7 = vector.load %arg3[%c0_1, %c0_2] : memref<16x128xf32, #tpu.memory_space<vmem>>, vector<16x128xf32>
    %8 = math.absf %7 : vector<16x128xf32>
    %9 = vector.broadcast %5 : f32 to vector<16x128xf32>
    %10 = arith.cmpf olt, %8, %9 : vector<16x128xf32>
    %cst = arith.constant 5.000000e-01 : f32
    %11 = vector.broadcast %cst : f32 to vector<16x128xf32>
    %12 = arith.mulf %11, %8 : vector<16x128xf32>
    %13 = arith.mulf %12, %8 : vector<16x128xf32>
    %14 = vector.broadcast %5 : f32 to vector<16x128xf32>
    %15 = arith.mulf %8, %14 : vector<16x128xf32>
    %16 = vector.broadcast %6 : f32 to vector<16x128xf32>
    %17 = arith.subf %15, %16 : vector<16x128xf32>
    %18 = arith.select %10, %13, %17 : vector<16x128xi1>, vector<16x128xf32>
    %c0_i32_3 = arith.constant 0 : i32
    %19 = arith.cmpi slt, %1, %c0_i32_3 : i32
    %20 = arith.extui %19 : i1 to i32
    %c0_i32_4 = arith.constant 0 : i32
    %21 = arith.cmpi ne, %20, %c0_i32_4 : i32
    scf.if %21 {
      %c0_7 = arith.constant 0 : index
      %c0_8 = arith.constant 0 : index
      %25 = vector.load %arg4[%c0_7, %c0_8] : memref<8x128xf32, #tpu.memory_space<vmem>>, vector<8x128xf32>
      %26 = vector.shape_cast %18 : vector<16x128xf32> to vector<2x8x128xf32>
      %cst_9 = arith.constant dense<0.000000e+00> : vector<8x128xf32>
      %27 = vector.multi_reduction <add>, %26, %cst_9 [0] : vector<2x8x128xf32> to vector<8x128xf32>
      %28 = arith.addf %25, %27 : vector<8x128xf32>
      %c0_10 = arith.constant 0 : index
      %c0_11 = arith.constant 0 : index
      %29 = vector.load %arg4[%c0_10, %c0_11] : memref<8x128xf32, #tpu.memory_space<vmem>>, vector<8x128xf32>
      tpu.vector_store %arg4[%c0_10, %c0_11], %28 {strides = array<i32>} : memref<8x128xf32, #tpu.memory_space<vmem>>, vector<8x128xf32>,
    } else {
    }
    %c0_i32_5 = arith.constant 0 : i32
    %22 = arith.cmpi eq, %1, %c0_i32_5 : i32
    %23 = arith.extui %22 : i1 to i32
    %c0_i32_6 = arith.constant 0 : i32
    %24 = arith.cmpi ne, %23, %c0_i32_6 : i32
    scf.if %24 {
      %25 = tpu.iota {dimensions = array<i32: 0>} : vector<16x128xi32>
      %c128_i32 = arith.constant 128 : i32
      %26 = vector.broadcast %c128_i32 : i32 to vector<16x128xi32>
      %27 = arith.muli %25, %26 : vector<16x128xi32>
      %28 = tpu.iota {dimensions = array<i32: 1>} : vector<16x128xi32>
      %29 = arith.addi %27, %28 : vector<16x128xi32>
      %c2048_i32 = arith.constant 2048 : i32
      %30 = vector.broadcast %c2048_i32 : i32 to vector<16x128xi32>
      %31 = arith.cmpi slt, %29, %30 : vector<16x128xi32>
      %cst_7 = arith.constant 0.000000e+00 : f32
      %32 = vector.broadcast %cst_7 : f32 to vector<16x128xf32>
      %33 = arith.select %31, %18, %32 : vector<16x128xi1>, vector<16x128xf32>
      %c0_8 = arith.constant 0 : index
      %c0_9 = arith.constant 0 : index
      %34 = vector.load %arg4[%c0_8, %c0_9] : memref<8x128xf32, #tpu.memory_space<vmem>>, vector<8x128xf32>
      %35 = vector.shape_cast %33 : vector<16x128xf32> to vector<2x8x128xf32>
      %cst_10 = arith.constant dense<0.000000e+00> : vector<8x128xf32>
      %36 = vector.multi_reduction <add>, %35, %cst_10 [0] : vector<2x8x128xf32> to vector<8x128xf32>
      %37 = arith.addf %34, %36 : vector<8x128xf32>
      %c0_11 = arith.constant 0 : index
      %c0_12 = arith.constant 0 : index
      %38 = vector.load %arg4[%c0_11, %c0_12] : memref<8x128xf32, #tpu.memory_space<vmem>>, vector<8x128xf32>
      tpu.vector_store %arg4[%c0_11, %c0_12], %37 {strides = array<i32>} : memref<8x128xf32, #tpu.memory_space<vmem>>, vector<8x128xf32>,
    } else {
    }
    return
  }
  func.func @transform_0(%arg0: i32, %arg1: i32) -> i32 {
    %c0_i32 = arith.constant 0 : i32
    %c0_i32_0 = arith.constant 0 : i32
    return %c0_i32 : i32
  }
  func.func @transform_1(%arg0: i32, %arg1: i32) -> (i32, i32) {
    %c1_i32 = arith.constant 1 : i32
    %0 = arith.muli %arg0, %c1_i32 : i32
    %1 = arith.addi %0, %arg1 : i32
    %c0_i32 = arith.constant 0 : i32
    %2 = arith.minsi %1, %c0_i32 : i32
    %c0_i32_0 = arith.constant 0 : i32
    %c0_i32_1 = arith.constant 0 : i32
    return %2, %c0_i32_0 : i32, i32
  }
  func.func @transform_2(%arg0: i32, %arg1: i32) -> (i32, i32) {
    %c0_i32 = arith.constant 0 : i32
    %c0_i32_0 = arith.constant 0 : i32
    return %arg0, %c0_i32 : i32, i32
  }
}

</mosaic_0001>

<llo_original>
// kernel: tpu_custom_call.1
$region0: #{tpu_custom_call.1}
  #allocation0 [shape = 'u32[]', space=smem, size = 0x4, offset = 0x4, fixed_abs, tag = 'smem constant byte address 0x4 - core index']
  #allocation1 [shape = 'u32[144,128]{1,0:T(1,128)}', space=vmem, size = 0x12000, scoped, tag = 'internal scratch']
  %s0 = inlined_call_operand.hbm [shape: f32[2], index: 0, kind: input, shape index: {}]
  %s1 = inlined_call_operand.hbm [shape: f32[16,128], index: 1, kind: input, shape index: {}]
  %s2 = inlined_call_operand.hbm [shape: f32[16,128], index: 2, kind: output, shape index: {}]
  %s3 = sld [smem:[#allocation0]]
  $region61: #{tpu_custom_call.1} parent=0
    _
  %s5 = ssub.s32 1, %s3
  %s6 = scalar_select 0, %s5, %s3
  $region1: #{tpu_custom_call.1} parent=0
    #allocation2 [shape = 'u8[512]{0}', space=smem, size = 0x200, scoped, tag = 'input window, operand 0, single buffered']
    #allocation3 [shape = 's32[2]{0}', space=sflag, size = 0x8, scoped, tag = 'scoped memory for tpu_custom_call.1']
    #allocation4 [shape = 's32[2]{0}', space=sflag, size = 0x8, scoped, tag = 'scoped memory for tpu_custom_call.1']
    #allocation5 [shape = 's32[2]{0}', space=sflag, size = 0x8, scoped, tag = 'scoped memory for tpu_custom_call.1']
    #allocation6 [shape = 'u8[16384]{0}', space=vmem, size = 0x4000, scoped, tag = 'input window, operand 1']
    #allocation7 [shape = 'u8[8192]{0}', space=vmem, size = 0x2000, scoped, tag = 'output window, operand 0']
    %7 = vsyncpa [#allocation5], 0
    %8 = vsyncpa [#allocation3], 0
    %s9 = scalar_lea.sflag [#allocation3], 1
    %10 = vsyncpa %s9, 0
    %11 = vsyncpa [#allocation4], 0
    %s12 = scalar_lea.sflag [#allocation4], 1
    %13 = vsyncpa %s12, 0
    loop: start=0, step=1, limit=4
    $region2: #{tpu_custom_call.1} parent=1 // loop_pre_header
      _
    $region3: #{tpu_custom_call.1} parent=1 // loop_header
      %s15 = sphi 0, %s19
      %p16 = scmp.ge.s32.totalorder %s15, 4
      %s22 = sphi 0, %s34
      %s23 = sphi 0, %s30
      %s24 = sphi 0, %s22
      %s25 = sphi 0, %s23
      %s26 = sphi 0, %s24
      %s27 = sphi 0, %s25
      %s35 = sphi 0, %s35
      %s37 = sphi 0, %s35
      %s38 = sphi 0, %s37
      %s52 = sphi 0, %s38
      %s64 = sphi 0, %s66
      %s67 = sphi 0, %s64
      %s68 = sphi 0, %s67
      %s84 = sphi 0, %s68
      %s90 = sphi 0, %s92
      %s93 = sphi 0, %s90
      %s94 = sphi 0, %s93
      %s110 = sphi 0, %s94
    $region4: #{tpu_custom_call.1} parent=1 // loop_header_branch
      %18 = sbr.rel (%p16) target = $region8
    $region5: #{tpu_custom_call.1} parent=1 // loop_body
      %s20 = ssub.s32 %s15, 1
      %s21 = ssub.s32 %s15, 2
      %s28 = sadd.s32 1, %s23
      %p29 = scmp.ge.s32.totalorder %s28, 1
      %s30 = scalar_select %p29, 0, %s28
      %s31 = sadd.s32 1, %s22
      %s32 = scalar_select %p29, %s31, %s22
      %p33 = scmp.ge.s32.totalorder %s32, 2
      %s34 = scalar_select %p33, 0, %s32
      %s36 = sadd.s32 %s35, 1
      %p39 = scmp.eq.s32.totalorder %s15, 1
      %p40 = scmp.ne.s32.totalorder %s35, %s37
      %p41 = scmp.eq.s32.totalorder %s15, 0
      %p42 = por %p40, %p41
      %p43 = scmp.ne.s32.totalorder %s35, %s37
      %p44 = scmp.eq.s32.totalorder %s20, 1
      %p45 = por %p43, %p44
      %p46 = scmp.ne.s32.totalorder %s37, %s38
      %p47 = scmp.eq.s32.totalorder %s20, 0
      %p48 = por %p46, %p47
      %p49 = scmp.ne.s32.totalorder %s37, %s38
      %p50 = scmp.eq.s32.totalorder %s21, 1
      %p51 = por %p49, %p50
      %p53 = scmp.ne.s32.totalorder %s38, %s52
      %p54 = scmp.eq.s32.totalorder %s21, 0
      %p55 = por %p53, %p54
      %s56 = sadd.s32 %s22, %s23
      %p57 = scmp.lt.s32.totalorder %s56, 0
      %s58 = scalar_select %p57, %s56, 0
      %s59 = sadd.s32 %s34, %s30
      %p60 = scmp.lt.s32.totalorder %s59, 0
      %s61 = scalar_select %p60, %s59, 0
      %s62 = ssub.s32 %s58, %s61
      %p63 = scmp.eq.s32.totalorder %s62, 0
      %s65 = sadd.s32 %s64, 1
      %s66 = scalar_select %p63, %s64, %s65
      %p69 = pneg %p63
      %p70 = scmp.eq.s32.totalorder %s15, 1
      %p71 = por %p69, %p70
      %p72 = scmp.ne.s32.totalorder %s64, %s67
      %p73 = scmp.eq.s32.totalorder %s15, 0
      %p74 = por %p72, %p73
      %p75 = scmp.ne.s32.totalorder %s64, %s67
      %p76 = scmp.eq.s32.totalorder %s20, 1
      %p77 = por %p75, %p76
      %p78 = scmp.ne.s32.totalorder %s67, %s68
      %p79 = scmp.eq.s32.totalorder %s20, 0
      %p80 = por %p78, %p79
      %p81 = scmp.ne.s32.totalorder %s67, %s68
      %p82 = scmp.eq.s32.totalorder %s21, 1
      %p83 = por %p81, %p82
      %p85 = scmp.ne.s32.totalorder %s68, %s84
      %p86 = scmp.eq.s32.totalorder %s21, 0
      %p87 = por %p85, %p86
      %s88 = ssub.s32 %s22, %s34
      %p89 = scmp.eq.s32.totalorder %s88, 0
      %s91 = sadd.s32 %s90, 1
      %s92 = scalar_select %p89, %s90, %s91
      %p95 = pneg %p89
      %p96 = scmp.eq.s32.totalorder %s15, 1
      %p97 = por %p95, %p96
      %p98 = scmp.ne.s32.totalorder %s90, %s93
      %p99 = scmp.eq.s32.totalorder %s15, 0
      %p100 = por %p98, %p99
      %p101 = scmp.ne.s32.totalorder %s90, %s93
      %p102 = scmp.eq.s32.totalorder %s20, 1
      %p103 = por %p101, %p102
      %p104 = scmp.ne.s32.totalorder %s93, %s94
      %p105 = scmp.eq.s32.totalorder %s20, 0
      %p106 = por %p104, %p105
      %p107 = scmp.ne.s32.totalorder %s93, %s94
      %p108 = scmp.eq.s32.totalorder %s21, 1
      %p109 = por %p107, %p108
      %p111 = scmp.ne.s32.totalorder %s94, %s110
      %p112 = scmp.eq.s32.totalorder %s21, 0
      %p113 = por %p111, %p112
      %p114 = scmp.le.s32.totalorder 1, %s15
      %p115 = scmp.lt.s32.totalorder %s15, 3
      %p116 = pnand %p114, %p115
      %p117 = pneg %p116
      // Predicated region
      $region9: #{tpu_custom_call.1} parent=5 // pred_check
        _
      $region10: #{tpu_custom_call.1} parent=5 // pred_check_branch
        %119 = sbr.rel (%p116) target = $region12
      $region11: #{tpu_custom_call.1} parent=5 // pred_region
        %s120 = ssub.s32 %s15, 1
        // Predicated region
        $region13: #{tpu_custom_call.1} parent=11 // pred_check
          %p121 = pneg %p48
        $region14: #{tpu_custom_call.1} parent=11 // pred_check_branch
          %123 = sbr.rel (%p121) target = $region16
        $region15: #{tpu_custom_call.1} parent=11 // pred_region
          %s125 = ssub.s32 16, 16
          %126 = vsyncadd [#allocation5], %s125
          %129 = dma.hbm_to_smem %s0, 16, [#allocation2], [#allocation5]
        $region16: #{tpu_custom_call.1} parent=11 // pred_fallthru
          _
      $region12: #{tpu_custom_call.1} parent=5 // pred_fallthru
        _
      %p130 = scmp.lt.s32.totalorder %s15, 2
      // Predicated region
      $region17: #{tpu_custom_call.1} parent=5 // pred_check
        %p131 = pneg %p130
      $region18: #{tpu_custom_call.1} parent=5 // pred_check_branch
        %133 = sbr.rel (%p131) target = $region20
      $region19: #{tpu_custom_call.1} parent=5 // pred_region
        // Predicated region
        $region21: #{tpu_custom_call.1} parent=19 // pred_check
          %p134 = pneg %p74
        $region22: #{tpu_custom_call.1} parent=19 // pred_check_branch
          %136 = sbr.rel (%p134) target = $region24
        $region23: #{tpu_custom_call.1} parent=19 // pred_region
          %s137 = sand.u32 %s64, 1
          %s138 = scalar_lea.sflag [#allocation3], %s137
          %s139 = sand.u32 %s64, 1
          %s140 = smul.addr %s139, 16
          %s141 = scalar_lea.vmem [#allocation6], %s140
          %s142 = sadd.s32 %s22, %s23
          %p143 = scmp.lt.s32.totalorder %s142, 0
          %s144 = scalar_select %p143, %s142, 0
          %s145 = smul.u32 2, %s144
          %s147 = ssub.s32 256, 256
          %148 = vsyncadd %s138, %s147
          %s149 = smul.addr %s145, 128
          %s150 = scalar_lea.hbm %s1, %s149
          %s151 = sshll.u32 %s141, 4
          %s152 = int_to_ptr.vmem [resolvable:$true] %s151
          %157 = dma.hbm_to_vmem [thread:$0]  %s150, 256, %s152, %s138, 128, 128, 8
        $region24: #{tpu_custom_call.1} parent=19 // pred_fallthru
          _
      $region20: #{tpu_custom_call.1} parent=5 // pred_fallthru
        _
      %p158 = scmp.le.s32.totalorder 1, %s15
      %p159 = scmp.lt.s32.totalorder %s15, 3
      %p160 = pnand %p158, %p159
      %p161 = pneg %p160
      // Predicated region
      $region25: #{tpu_custom_call.1} parent=5 // pred_check
        _
      $region26: #{tpu_custom_call.1} parent=5 // pred_check_branch
        %163 = sbr.rel (%p160) target = $region28
      $region27: #{tpu_custom_call.1} parent=5 // pred_region
        %s164 = ssub.s32 %s15, 1
        // Predicated region
        $region29: #{tpu_custom_call.1} parent=27 // pred_check
          %p165 = pneg %p48
        $region30: #{tpu_custom_call.1} parent=27 // pred_check_branch
          %167 = sbr.rel (%p165) target = $region32
        $region31: #{tpu_custom_call.1} parent=27 // pred_region
          %168 = dma.done [#allocation5], 16
        $region32: #{tpu_custom_call.1} parent=27 // pred_fallthru
          _
        %s169 = sand.u32 %s67, 1
        %s170 = scalar_lea.sflag [#allocation3], %s169
        %s171 = sand.u32 %s67, 1
        %s172 = smul.addr %s171, 16
        %s173 = scalar_lea.vmem [#allocation6], %s172
        // Predicated region
        $region33: #{tpu_custom_call.1} parent=27 // pred_check
          %p174 = pneg %p80
        $region34: #{tpu_custom_call.1} parent=27 // pred_check_branch
          %176 = sbr.rel (%p174) target = $region36
        $region35: #{tpu_custom_call.1} parent=27 // pred_region
          %177 = dma.done %s170, 256
        $region36: #{tpu_custom_call.1} parent=27 // pred_fallthru
          _
        %178 = sfence
        %p179 = pneg %p48
        %p180 = pneg %p45
        %s181 = sand.u32 %s67, 1
        %s182 = scalar_lea.sflag [#allocation3], %s181
        %s183 = sand.u32 %s67, 1
        %s184 = smul.addr %s183, 16
        %s185 = scalar_lea.vmem [#allocation6], %s184
        %p186 = pneg %p80
        %p187 = pneg %p77
        %p188 = pneg %p106
        %p189 = pneg %p103
        %s190 = sand.u32 %s93, 1
        %s191 = scalar_lea.sflag [#allocation4], %s190
        %s192 = sand.u32 %s93, 1
        %s193 = smul.addr %s192, 8
        %s194 = scalar_lea.vmem [#allocation7], %s193
        %s195 = sadd.s32 %s24, %s25
        %p196 = scmp.lt.s32.totalorder %s195, 0
        %s197 = scalar_select %p196, %s195, 0
        %s198 = smul.u32 2, %s197
        %s199 = sadd.s32 %s24, %s25
        %p200 = scmp.eq.s32.totalorder %s25, 0
        // Predicated region
        $region37: #{tpu_custom_call.1} parent=27 // pred_check
          %p201 = pneg %p200
        $region38: #{tpu_custom_call.1} parent=27 // pred_check_branch
          %203 = sbr.rel (%p201) target = $region40
        $region39: #{tpu_custom_call.1} parent=27 // pred_region
          %204 = vst [vmem:[%s194] sm:$0xff] 0.0
        $region40: #{tpu_custom_call.1} parent=27 // pred_fallthru
          _
        %s205 = sld [smem:[#allocation2]]
        %s206 = sld [smem:[#allocation2 + $0x1]]
        %v207 = vld [vmem:[%s173] sm:$0xff]
        %v208 = vld [vmem:[%s173 + $0x8] sm:$0xff]
        %v209 = vand.u32 2147483647, %v207
        %v210 = vand.u32 2147483647, %v208
        %v211 = vstv %s205
        %vm212 = vcmp.lt.f32.partialorder %v209, %v211
        %vm213 = vcmp.lt.f32.partialorder %v210, %v211
        %v214 = vmul.f32 %v209, 0.5
        %v215 = vmul.f32 %v210, 0.5
        %v216 = vmul.f32 %v214, %v209
        %v217 = vmul.f32 %v215, %v210
        %v218 = vmul.f32 %v209, %v211
        %v219 = vmul.f32 %v210, %v211
        %v220 = vstv %s206
        %v221 = vsub.f32 %v218, %v220
        %v222 = vsub.f32 %v219, %v220
        %v223 = vsel %vm212, %v216, %v221
        %v224 = vsel %vm213, %v217, %v222
        %p225 = scmp.lt.s32.totalorder %s199, 0
        // Predicated region
        $region41: #{tpu_custom_call.1} parent=27 // pred_check
          %p226 = pneg %p225
        $region42: #{tpu_custom_call.1} parent=27 // pred_check_branch
          %228 = sbr.rel (%p226) target = $region44
        $region43: #{tpu_custom_call.1} parent=27 // pred_region
          %v229 = vld [vmem:[%s194] sm:$0xff]
          %v230 = vadd.f32 %v223, %v224
          %v231 = vadd.f32 %v229, %v230
          %232 = vst [vmem:[%s194] sm:$0xff] %v231
        $region44: #{tpu_custom_call.1} parent=27 // pred_fallthru
          _
        %p233 = scmp.eq.s32.totalorder %s199, 0
        // Predicated region
        $region45: #{tpu_custom_call.1} parent=27 // pred_check
          %p234 = pneg %p233
        $region46: #{tpu_custom_call.1} parent=27 // pred_check_branch
          %236 = sbr.rel (%p234) target = $region48
        $region47: #{tpu_custom_call.1} parent=27 // pred_region
          %v237 = vlaneseq
          %v238 = vshrl.u32 %v237, 7
          %v239 = vadd.s32 %v238, 8
          %v240 = vmul.u32 %v238, 128
          %v241 = vmul.u32 %v239, 128
          %v242 = vlaneseq
          %v243 = vand.u32 %v242, 127
          %v244 = vadd.s32 %v240, %v243
          %v245 = vadd.s32 %v241, %v243
          %vm246 = vcmp.lt.s32.totalorder %v244, 2048
          %vm247 = vcmp.lt.s32.totalorder %v245, 2048
          %v248 = vsel %vm246, %v223, 0.0
          %v249 = vsel %vm247, %v224, 0.0
          %v250 = vld [vmem:[%s194] sm:$0xff]
          %v251 = vadd.f32 %v248, %v249
          %v252 = vadd.f32 %v250, %v251
          %253 = vst [vmem:[%s194] sm:$0xff] %v252
        $region48: #{tpu_custom_call.1} parent=27 // pred_fallthru
          _
        %s254 = sand.u32 %s93, 1
        %s255 = scalar_lea.sflag [#allocation4], %s254
        %s256 = sand.u32 %s93, 1
        %s257 = smul.addr %s256, 8
        %s258 = scalar_lea.vmem [#allocation7], %s257
        // Predicated region
        $region49: #{tpu_custom_call.1} parent=27 // pred_check
          %p259 = pneg %p103
        $region50: #{tpu_custom_call.1} parent=27 // pred_check_branch
          %261 = sbr.rel (%p259) target = $region52
        $region51: #{tpu_custom_call.1} parent=27 // pred_region
          %s263 = ssub.s32 128, 128
          %264 = vsyncadd %s255, %s263
          %s265 = smul.addr %s24, 128
          %s266 = scalar_lea.hbm %s2, %s265
          %s268 = sshll.u32 %s258, 4
          %s269 = int_to_ptr.vmem [resolvable:$true] %s268
          %271 = dma.vmem_to_hbm [thread:$0]  %s269, 128, %s266, %s255
        $region52: #{tpu_custom_call.1} parent=27 // pred_fallthru
          _
      $region28: #{tpu_custom_call.1} parent=5 // pred_fallthru
        _
      %p272 = scmp.le.s32.totalorder 2, %s15
      // Predicated region
      $region53: #{tpu_custom_call.1} parent=5 // pred_check
        %p273 = pneg %p272
      $region54: #{tpu_custom_call.1} parent=5 // pred_check_branch
        %275 = sbr.rel (%p273) target = $region56
      $region55: #{tpu_custom_call.1} parent=5 // pred_region
        %s276 = ssub.s32 %s15, 2
        // Predicated region
        $region57: #{tpu_custom_call.1} parent=55 // pred_check
          %p277 = pneg %p109
        $region58: #{tpu_custom_call.1} parent=55 // pred_check_branch
          %279 = sbr.rel (%p277) target = $region60
        $region59: #{tpu_custom_call.1} parent=55 // pred_region
          %s280 = sand.u32 %s94, 1
          %s281 = scalar_lea.sflag [#allocation4], %s280
          %s282 = sand.u32 %s94, 1
          %s283 = smul.addr %s282, 8
          %s284 = scalar_lea.vmem [#allocation7], %s283
          %285 = dma.done %s281, 128
        $region60: #{tpu_custom_call.1} parent=55 // pred_fallthru
          _
      $region56: #{tpu_custom_call.1} parent=5 // pred_fallthru
        _
    $region6: #{tpu_custom_call.1} parent=1 // loop_footer
      %s19 = sadd.s32 1, %s15
    $region7: #{tpu_custom_call.1} parent=1 // loop_footer_branch
      %14 = sbr.rel target = $region3
    $region8: #{tpu_custom_call.1} parent=1 // loop_exit
      _
    %286 = vsyncpa [#allocation3], 1
    %s287 = scalar_lea.sflag [#allocation3], 1
    %288 = vsyncpa %s287, 1
    %289 = vsyncpa [#allocation4], 1
    %s290 = scalar_lea.sflag [#allocation4], 1
    %291 = vsyncpa %s290, 1
    %292 = vsyncpa [#allocation5], 1
    %s293 = scalar_lea.sflag [#allocation5], 1
    %294 = vsyncpa %s293, 1

</llo_original>
